<compile_context>
chip_gen: v7x
topology: tpu7x:2x2x1
jax: 0.10.0
libtpu: 0.0.40
codegen_flags: <defaults>
</compile_context>

<pallas_src>
import jax
import jax.numpy as jnp
import numpy as np
from jax.experimental import pallas as pl
from jax.experimental.pallas import tpu as pltpu

NEG_SLOPE = 0.01   # F.leaky_relu default negative_slope
LANE = 128         # vreg lane width
SUBLANE = 8        # vreg sublanes (f32)


def _round_up(x, m):
    return ((x + m - 1) // m) * m


def _leaky_relu(x):
    return jnp.where(x > 0, x, NEG_SLOPE * x)


def encoder_kernel(x_ref, w1_ref, b1_ref, w2_ref, b2_ref, w34_ref, b34_ref, out_ref):
    # Layer 1 + 2: MXU matmuls with f32 accumulation, leaky_relu on the VPU.
    h = jnp.dot(x_ref[...], w1_ref[...], preferred_element_type=jnp.float32) + b1_ref[...]
    h = _leaky_relu(h)
    h = jnp.dot(h, w2_ref[...], preferred_element_type=jnp.float32) + b2_ref[...]
    h = _leaky_relu(h)
    # Fused e3 || e4: one matmul, one lane-dense [block_b, out_p] store.
    out_ref[...] = (jnp.dot(h, w34_ref[...], preferred_element_type=jnp.float32)
                    + b34_ref[...]).astype(out_ref.dtype)


def prepare_params(params):
    """Fuse e3/e4 into one weight/bias and zero-pad every feature dim up to a
    multiple of 128 lanes. Zero padding is numerically inert (padded hidden
    columns stay exactly 0 through leaky_relu and contribute nothing downstream);
    the wrapper slices the padding off the output."""
    w1, b1 = params["w1"], params["b1"]
    w2, b2 = params["w2"], params["b2"]
    w34 = jnp.concatenate([params["w3"], params["w4"]], axis=1)
    b34 = jnp.concatenate([params["b3"], params["b4"]], axis=1)

    in_dim, hid = w1.shape
    out2 = w34.shape[1]
    in_p, hid_p, out_p = (_round_up(d, LANE) for d in (in_dim, hid, out2))

    pad2 = lambda a, r, c: jnp.pad(a, ((0, r - a.shape[0]), (0, c - a.shape[1])))
    prepared = dict(
        w1=pad2(w1, in_p, hid_p), b1=pad2(b1, 1, hid_p),
        w2=pad2(w2, hid_p, hid_p), b2=pad2(b2, 1, hid_p),
        w34=pad2(w34, hid_p, out_p), b34=pad2(b34, 1, out_p),
    )
    return prepared, (in_p, hid_p, out_p)


def encoder_forward(x, params, *, max_block_b=256, interpret=False):
    B, input_dim = x.shape
    latent_dim = params["w3"].shape[1]

    # Layout plumbing (fuse + lane-pad). In production, cache `prep` across calls.
    prep, (in_p, hid_p, out_p) = prepare_params(params)

    # Batch tile: as big as possible (one shot for small B), multiples of the
    # sublane count, shrunk only if the resident working set would exceed a
    # v7x-safe VMEM budget (weights + double-buffered x/out tiles + hidden act).
    weight_bytes = 4 * (in_p * hid_p + hid_p * hid_p + hid_p * out_p + 2 * hid_p + out_p)
    budget = 24 * 1024 * 1024
    block_b = min(_round_up(B, SUBLANE), max_block_b)
    while block_b > SUBLANE and (
        2 * weight_bytes + 4 * block_b * (2 * in_p + 2 * out_p + hid_p)
    ) > budget:
        block_b //= 2
    block_b = max(_round_up(block_b, SUBLANE), SUBLANE)
    # TODO(synk): for very large hidden_dim on v7x, add a K-tiled (reduction-axis)
    # path for w2 instead of keeping all weights VMEM-resident.

    B_pad = _round_up(B, block_b)
    x_p = jnp.pad(x, ((0, B_pad - B), (0, in_p - input_dim)))

    grid = (B_pad // block_b,)
    const = lambda shape: pl.BlockSpec(shape, lambda i: (0, 0))  # resident weights

    flops = 2 * B_pad * (in_p * hid_p + hid_p * hid_p + hid_p * out_p)
    bytes_accessed = weight_bytes + 4 * B_pad * (in_p + out_p)
    cost = pl.CostEstimate(flops=flops, transcendentals=0, bytes_accessed=bytes_accessed)

    vmem_need = 2 * weight_bytes + 4 * block_b * (2 * in_p + 2 * out_p + hid_p)
    vmem_limit = int(min(max(2 * vmem_need, 4 << 20), 96 << 20))

    out = pl.pallas_call(
        encoder_kernel,
        out_shape=jax.ShapeDtypeStruct((B_pad, out_p), x.dtype),
        grid_spec=pl.GridSpec(
            grid=grid,
            in_specs=[
                pl.BlockSpec((block_b, in_p), lambda i: (i, 0)),  # x tile
                const((in_p, hid_p)),    # w1
                const((1, hid_p)),       # b1
                const((hid_p, hid_p)),   # w2
                const((1, hid_p)),       # b2
                const((hid_p, out_p)),   # w3 || w4 (fused)
                const((1, out_p)),       # b3 || b4 (fused)
            ],
            out_specs=pl.BlockSpec((block_b, out_p), lambda i: (i, 0)),
        ),
        compiler_params=pltpu.CompilerParams(
            dimension_semantics=("parallel",),
            vmem_limit_bytes=vmem_limit,
        ),
        cost_estimate=cost,
        interpret=interpret,
    )(x_p, prep["w1"], prep["b1"], prep["w2"], prep["b2"], prep["w34"], prep["b34"])

    mean = out[:B, :latent_dim]
    logvar = out[:B, latent_dim:2 * latent_dim]
    return mean, logvar


def init_params(key, input_dim, hidden_dim, latent_dim):
    """Deterministic init mimicking torch.nn.Linear (uniform +/- 1/sqrt(fan_in)).
    Weights are stored [in, out] so the kernel computes y = x @ W + b."""
    def linear(k, fan_in, fan_out):
        kw, kb = jax.random.split(k)
        bound = 1.0 / np.sqrt(fan_in)
        w = jax.random.uniform(kw, (fan_in, fan_out), jnp.float32, -bound, bound)
        b = jax.random.uniform(kb, (1, fan_out), jnp.float32, -bound, bound)
        return w, b

    k1, k2, k3, k4 = jax.random.split(key, 4)
    w1, b1 = linear(k1, input_dim, hidden_dim)
    w2, b2 = linear(k2, hidden_dim, hidden_dim)
    w3, b3 = linear(k3, hidden_dim, latent_dim)
    w4, b4 = linear(k4, hidden_dim, latent_dim)
    return dict(w1=w1, b1=b1, w2=w2, b2=b2, w3=w3, b3=b3, w4=w4, b4=b4)


def encoder_reference(x, p):
    h = jax.nn.leaky_relu(x @ p["w1"] + p["b1"], NEG_SLOPE)
    h = jax.nn.leaky_relu(h @ p["w2"] + p["b2"], NEG_SLOPE)
    return h @ p["w3"] + p["b3"], h @ p["w4"] + p["b4"]


if __name__ == "__main__":
    batch, input_dim, hidden_dim, latent_dim = 16, 32, 64, 16

    key = jax.random.PRNGKey(0)
    kx, kp = jax.random.split(key)
    x = jax.random.normal(kx, (batch, input_dim), jnp.float32)
    params = init_params(kp, input_dim, hidden_dim, latent_dim)

    mean, logvar = jax.block_until_ready(encoder_forward(x, params))

    mean_ref, logvar_ref = encoder_reference(x, params)
    assert np.allclose(np.asarray(mean), np.asarray(mean_ref), atol=1e-5, rtol=1e-5)
    assert np.allclose(np.asarray(logvar), np.asarray(logvar_ref), atol=1e-5, rtol=1e-5)

    print("KERNEL_OK")
</pallas_src>

<mosaic_0001>
module attributes {stable_mosaic.version = 11 : i64} {
  func.func @encoder_kernel(%arg0: i32, %arg1: memref<16x128xf32, #tpu.memory_space<vmem>>, %arg2: memref<128x128xf32, #tpu.memory_space<vmem>>, %arg3: memref<1x128xf32, #tpu.memory_space<vmem>>, %arg4: memref<128x128xf32, #tpu.memory_space<vmem>>, %arg5: memref<1x128xf32, #tpu.memory_space<vmem>>, %arg6: memref<128x128xf32, #tpu.memory_space<vmem>>, %arg7: memref<1x128xf32, #tpu.memory_space<vmem>>, %arg8: memref<16x128xf32, #tpu.memory_space<vmem>>) attributes {dimension_semantics = [#tpu.dimension_semantics<parallel>], iteration_bounds = array<i64: 1>, scalar_prefetch = 0 : i64, scratch_operands = 0 : i64, tpu.core_type = #tpu.core_type<tc>, window_params = [{transform_indices = @transform_0, window_bounds = array<i64: 16, 128>}, {pipeline_mode = #tpu.pipeline_mode<synchronous>, transform_indices = @transform_1, window_bounds = array<i64: 128, 128>}, {pipeline_mode = #tpu.pipeline_mode<synchronous>, transform_indices = @transform_2, window_bounds = array<i64: 1, 128>}, {pipeline_mode = #tpu.pipeline_mode<synchronous>, transform_indices = @transform_3, window_bounds = array<i64: 128, 128>}, {pipeline_mode = #tpu.pipeline_mode<synchronous>, transform_indices = @transform_4, window_bounds = array<i64: 1, 128>}, {pipeline_mode = #tpu.pipeline_mode<synchronous>, transform_indices = @transform_5, window_bounds = array<i64: 128, 128>}, {pipeline_mode = #tpu.pipeline_mode<synchronous>, transform_indices = @transform_6, window_bounds = array<i64: 1, 128>}, {transform_indices = @transform_7, window_bounds = array<i64: 16, 128>}]} {
    %c0 = arith.constant 0 : index
    %c0_0 = arith.constant 0 : index
    %0 = vector.load %arg1[%c0, %c0_0] : memref<16x128xf32, #tpu.memory_space<vmem>>, vector<16x128xf32>
    %c0_1 = arith.constant 0 : index
    %c0_2 = arith.constant 0 : index
    %1 = vector.load %arg2[%c0_1, %c0_2] : memref<128x128xf32, #tpu.memory_space<vmem>>, vector<128x128xf32>
    %cst = arith.constant dense<0.000000e+00> : vector<16x128xf32>
    %2 = tpu.matmul %0, %1, %cst {dimension_numbers = #tpu.dot_dimension_numbers<[1], [0], [0], [1], [0, 0, 1, 1], [], []>} : vector<16x128xf32>, vector<128x128xf32>, vector<16x128xf32> -> vector<16x128xf32>
    %c0_3 = arith.constant 0 : index
    %c0_4 = arith.constant 0 : index
    %3 = vector.load %arg3[%c0_3, %c0_4] : memref<1x128xf32, #tpu.memory_space<vmem>>, vector<1x128xf32>
    %4 = vector.broadcast %3 : vector<1x128xf32> to vector<16x128xf32>
    %5 = arith.addf %2, %4 : vector<16x128xf32>
    %cst_5 = arith.constant 0.000000e+00 : f32
    %6 = vector.broadcast %cst_5 : f32 to vector<16x128xf32>
    %7 = arith.cmpf ogt, %5, %6 : vector<16x128xf32>
    %cst_6 = arith.constant 0.00999999977 : f32
    %8 = vector.broadcast %cst_6 : f32 to vector<16x128xf32>
    %9 = arith.mulf %8, %5 : vector<16x128xf32>
    %10 = arith.select %7, %5, %9 : vector<16x128xi1>, vector<16x128xf32>
    %c0_7 = arith.constant 0 : index
    %c0_8 = arith.constant 0 : index
    %11 = vector.load %arg4[%c0_7, %c0_8] : memref<128x128xf32, #tpu.memory_space<vmem>>, vector<128x128xf32>
    %cst_9 = arith.constant dense<0.000000e+00> : vector<16x128xf32>
    %12 = tpu.matmul %10, %11, %cst_9 {dimension_numbers = #tpu.dot_dimension_numbers<[1], [0], [0], [1], [0, 0, 1, 1], [], []>} : vector<16x128xf32>, vector<128x128xf32>, vector<16x128xf32> -> vector<16x128xf32>
    %c0_10 = arith.constant 0 : index
    %c0_11 = arith.constant 0 : index
    %13 = vector.load %arg5[%c0_10, %c0_11] : memref<1x128xf32, #tpu.memory_space<vmem>>, vector<1x128xf32>
    %14 = vector.broadcast %13 : vector<1x128xf32> to vector<16x128xf32>
    %15 = arith.addf %12, %14 : vector<16x128xf32>
    %cst_12 = arith.constant 0.000000e+00 : f32
    %16 = vector.broadcast %cst_12 : f32 to vector<16x128xf32>
    %17 = arith.cmpf ogt, %15, %16 : vector<16x128xf32>
    %cst_13 = arith.constant 0.00999999977 : f32
    %18 = vector.broadcast %cst_13 : f32 to vector<16x128xf32>
    %19 = arith.mulf %18, %15 : vector<16x128xf32>
    %20 = arith.select %17, %15, %19 : vector<16x128xi1>, vector<16x128xf32>
    %c0_14 = arith.constant 0 : index
    %c0_15 = arith.constant 0 : index
    %21 = vector.load %arg6[%c0_14, %c0_15] : memref<128x128xf32, #tpu.memory_space<vmem>>, vector<128x128xf32>
    %cst_16 = arith.constant dense<0.000000e+00> : vector<16x128xf32>
    %22 = tpu.matmul %20, %21, %cst_16 {dimension_numbers = #tpu.dot_dimension_numbers<[1], [0], [0], [1], [0, 0, 1, 1], [], []>} : vector<16x128xf32>, vector<128x128xf32>, vector<16x128xf32> -> vector<16x128xf32>
    %c0_17 = arith.constant 0 : index
    %c0_18 = arith.constant 0 : index
    %23 = vector.load %arg7[%c0_17, %c0_18] : memref<1x128xf32, #tpu.memory_space<vmem>>, vector<1x128xf32>
    %24 = vector.broadcast %23 : vector<1x128xf32> to vector<16x128xf32>
    %25 = arith.addf %22, %24 : vector<16x128xf32>
    %c0_19 = arith.constant 0 : index
    %c0_20 = arith.constant 0 : index
    %26 = vector.load %arg8[%c0_19, %c0_20] : memref<16x128xf32, #tpu.memory_space<vmem>>, vector<16x128xf32>
    tpu.vector_store %arg8[%c0_19, %c0_20], %25 {strides = array<i32>} : memref<16x128xf32, #tpu.memory_space<vmem>>, vector<16x128xf32>,
    return
  }
  func.func @transform_0(%arg0: i32) -> (i32, i32) {
    %c0_i32 = arith.constant 0 : i32
    %c0_i32_0 = arith.constant 0 : i32
    return %arg0, %c0_i32 : i32, i32
  }
  func.func @transform_1(%arg0: i32) -> (i32, i32) {
    %c0_i32 = arith.constant 0 : i32
    %c0_i32_0 = arith.constant 0 : i32
    %c0_i32_1 = arith.constant 0 : i32
    return %c0_i32, %c0_i32_0 : i32, i32
  }
  func.func @transform_2(%arg0: i32) -> (i32, i32) {
    %c0_i32 = arith.constant 0 : i32
    %c0_i32_0 = arith.constant 0 : i32
    %c0_i32_1 = arith.constant 0 : i32
    return %c0_i32, %c0_i32_0 : i32, i32
  }
  func.func @transform_3(%arg0: i32) -> (i32, i32) {
    %c0_i32 = arith.constant 0 : i32
    %c0_i32_0 = arith.constant 0 : i32
    %c0_i32_1 = arith.constant 0 : i32
    return %c0_i32, %c0_i32_0 : i32, i32
  }
  func.func @transform_4(%arg0: i32) -> (i32, i32) {
    %c0_i32 = arith.constant 0 : i32
    %c0_i32_0 = arith.constant 0 : i32
    %c0_i32_1 = arith.constant 0 : i32
    return %c0_i32, %c0_i32_0 : i32, i32
  }
  func.func @transform_5(%arg0: i32) -> (i32, i32) {
    %c0_i32 = arith.constant 0 : i32
    %c0_i32_0 = arith.constant 0 : i32
    %c0_i32_1 = arith.constant 0 : i32
    return %c0_i32, %c0_i32_0 : i32, i32
  }
  func.func @transform_6(%arg0: i32) -> (i32, i32) {
    %c0_i32 = arith.constant 0 : i32
    %c0_i32_0 = arith.constant 0 : i32
    %c0_i32_1 = arith.constant 0 : i32
    return %c0_i32, %c0_i32_0 : i32, i32
  }
  func.func @transform_7(%arg0: i32) -> (i32, i32) {
    %c0_i32 = arith.constant 0 : i32
    %c0_i32_0 = arith.constant 0 : i32
    return %arg0, %c0_i32 : i32, i32
  }
}

</mosaic_0001>

<llo_original>
// kernel: tpu_custom_call.1
$region0: #{tpu_custom_call.1}
  #allocation0 [shape = 'u32[]', space=smem, size = 0x4, offset = 0x4, fixed_abs, tag = 'smem constant byte address 0x4 - core index']
  #allocation1 [shape = 'u32[144,128]{1,0:T(1,128)}', space=vmem, size = 0x12000, scoped, tag = 'internal scratch']
  %s0 = inlined_call_operand.hbm [shape: f32[16,128], index: 0, kind: input, shape index: {}]
  %s1 = inlined_call_operand.hbm [shape: f32[128,128], index: 1, kind: input, shape index: {}]
  %s2 = inlined_call_operand.vmem [shape: f32[1,128], index: 2, kind: input, shape index: {}]
  %s3 = inlined_call_operand.hbm [shape: f32[128,128], index: 3, kind: input, shape index: {}]
  %s4 = inlined_call_operand.vmem [shape: f32[1,128], index: 4, kind: input, shape index: {}]
  %s5 = inlined_call_operand.hbm [shape: f32[128,128], index: 5, kind: input, shape index: {}]
  %s6 = inlined_call_operand.vmem [shape: f32[1,128], index: 6, kind: input, shape index: {}]
  %s7 = inlined_call_operand.hbm [shape: f32[16,128], index: 7, kind: output, shape index: {}]
  %s8 = sld [smem:[#allocation0]]
  $region54: #{tpu_custom_call.1} parent=0
    _
  %s10 = ssub.s32 1, %s8
  %s11 = scalar_select 0, %s10, %s8
  $region1: #{tpu_custom_call.1} parent=0
    #allocation2 [shape = 'u8[8192]{0}', space=vmem, size = 0x2000, scoped, tag = 'input window, operand 0, single buffered']
    #allocation3 [shape = 's32[1]{0}', space=sflag, size = 0x4, scoped, tag = 'scoped memory for tpu_custom_call.1']
    #allocation4 [shape = 's32[1]{0}', space=sflag, size = 0x4, scoped, tag = 'scoped memory for tpu_custom_call.1']
    #allocation5 [shape = 'u8[65536]{0}', space=vmem, size = 0x10000, scoped, tag = 'input window, operand 1, single buffered']
    #allocation6 [shape = 's32[1]{0}', space=sflag, size = 0x4, scoped, tag = 'scoped memory for tpu_custom_call.1']
    #allocation7 [shape = 'u8[65536]{0}', space=vmem, size = 0x10000, scoped, tag = 'input window, operand 3, single buffered']
    #allocation8 [shape = 'u8[65536]{0}', space=vmem, size = 0x10000, scoped, tag = 'input window, operand 5, single buffered']
    #allocation9 [shape = 's32[1]{0}', space=sflag, size = 0x4, scoped, tag = 'scoped memory for tpu_custom_call.1']
    #allocation10 [shape = 'u8[8192]{0}', space=vmem, size = 0x2000, scoped, tag = 'output window, operand 0, single buffered']
    %12 = vsyncpa [#allocation3], 0
    %13 = vsyncpa [#allocation6], 0
    %14 = vsyncpa [#allocation9], 0
    %15 = vsyncpa [#allocation4], 0
    // Predicated region
    $region2: #{tpu_custom_call.1} parent=1 // pred_check
      _
    $region3: #{tpu_custom_call.1} parent=1 // pred_check_branch
      %17 = sbr.rel (0) target = $region5
    $region4: #{tpu_custom_call.1} parent=1 // pred_region
      %s19 = ssub.s32 256, 256
      %20 = vsyncadd [#allocation3], %s19
      %s21 = sshll.u32 [#allocation2], 4
      %s22 = int_to_ptr.vmem [resolvable:$true] %s21
      %27 = dma.hbm_to_vmem [thread:$0]  %s0, 256, %s22, [#allocation3], 128, 128, 8
    $region5: #{tpu_custom_call.1} parent=1 // pred_fallthru
      _
    // Predicated region
    $region6: #{tpu_custom_call.1} parent=1 // pred_check
      _
    $region7: #{tpu_custom_call.1} parent=1 // pred_check_branch
      %29 = sbr.rel (0) target = $region9
    $region8: #{tpu_custom_call.1} parent=1 // pred_region
      %s31 = ssub.s32 2048, 2048
      %32 = vsyncadd [#allocation6], %s31
      %s33 = sshll.u32 [#allocation5], 4
      %s34 = int_to_ptr.vmem [resolvable:$true] %s33
      %39 = dma.hbm_to_vmem [thread:$0]  %s1, 2048, %s34, [#allocation6], 128, 128, 8
    $region9: #{tpu_custom_call.1} parent=1 // pred_fallthru
      _
    // Predicated region
    $region10: #{tpu_custom_call.1} parent=1 // pred_check
      _
    $region11: #{tpu_custom_call.1} parent=1 // pred_check_branch
      %41 = sbr.rel (0) target = $region13
    $region12: #{tpu_custom_call.1} parent=1 // pred_region
      _
    $region13: #{tpu_custom_call.1} parent=1 // pred_fallthru
      _
    // Predicated region
    $region14: #{tpu_custom_call.1} parent=1 // pred_check
      _
    $region15: #{tpu_custom_call.1} parent=1 // pred_check_branch
      %43 = sbr.rel (0) target = $region17
    $region16: #{tpu_custom_call.1} parent=1 // pred_region
      %s45 = ssub.s32 2048, 2048
      %46 = vsyncadd [#allocation6], %s45
      %s47 = sshll.u32 [#allocation7], 4
      %s48 = int_to_ptr.vmem [resolvable:$true] %s47
      %53 = dma.hbm_to_vmem [thread:$0]  %s3, 2048, %s48, [#allocation6], 128, 128, 8
    $region17: #{tpu_custom_call.1} parent=1 // pred_fallthru
      _
    // Predicated region
    $region18: #{tpu_custom_call.1} parent=1 // pred_check
      _
    $region19: #{tpu_custom_call.1} parent=1 // pred_check_branch
      %55 = sbr.rel (0) target = $region21
    $region20: #{tpu_custom_call.1} parent=1 // pred_region
      _
    $region21: #{tpu_custom_call.1} parent=1 // pred_fallthru
      _
    // Predicated region
    $region22: #{tpu_custom_call.1} parent=1 // pred_check
      _
    $region23: #{tpu_custom_call.1} parent=1 // pred_check_branch
      %57 = sbr.rel (0) target = $region25
    $region24: #{tpu_custom_call.1} parent=1 // pred_region
      %s59 = ssub.s32 2048, 2048
      %60 = vsyncadd [#allocation9], %s59
      %s61 = sshll.u32 [#allocation8], 4
      %s62 = int_to_ptr.vmem [resolvable:$true] %s61
      %67 = dma.hbm_to_vmem [thread:$0]  %s5, 2048, %s62, [#allocation9], 128, 128, 8
    $region25: #{tpu_custom_call.1} parent=1 // pred_fallthru
      _
    // Predicated region
    $region26: #{tpu_custom_call.1} parent=1 // pred_check
      _
    $region27: #{tpu_custom_call.1} parent=1 // pred_check_branch
      %69 = sbr.rel (0) target = $region29
    $region28: #{tpu_custom_call.1} parent=1 // pred_region
      _
    $region29: #{tpu_custom_call.1} parent=1 // pred_fallthru
      _
    // Predicated region
    $region30: #{tpu_custom_call.1} parent=1 // pred_check
      _
    $region31: #{tpu_custom_call.1} parent=1 // pred_check_branch
      %71 = sbr.rel (0) target = $region33
    $region32: #{tpu_custom_call.1} parent=1 // pred_region
      %72 = dma.done [#allocation3], 256
    $region33: #{tpu_custom_call.1} parent=1 // pred_fallthru
      _
    // Predicated region
    $region34: #{tpu_custom_call.1} parent=1 // pred_check
      _
    $region35: #{tpu_custom_call.1} parent=1 // pred_check_branch
      %74 = sbr.rel (0) target = $region37
    $region36: #{tpu_custom_call.1} parent=1 // pred_region
      %75 = dma.done [#allocation6], 2048
    $region37: #{tpu_custom_call.1} parent=1 // pred_fallthru
      _
    // Predicated region
    $region38: #{tpu_custom_call.1} parent=1 // pred_check
      _
    $region39: #{tpu_custom_call.1} parent=1 // pred_check_branch
      %77 = sbr.rel (0) target = $region41
    $region40: #{tpu_custom_call.1} parent=1 // pred_region
      %78 = dma.done [#allocation6], 2048
    $region41: #{tpu_custom_call.1} parent=1 // pred_fallthru
      _
    // Predicated region
    $region42: #{tpu_custom_call.1} parent=1 // pred_check
      _
    $region43: #{tpu_custom_call.1} parent=1 // pred_check_branch
      %80 = sbr.rel (0) target = $region45
    $region44: #{tpu_custom_call.1} parent=1 // pred_region
      %81 = dma.done [#allocation9], 2048
    $region45: #{tpu_custom_call.1} parent=1 // pred_fallthru
      _
    %v82 = vld [vmem:[#allocation2] sm:$0xff]
    %v83 = vld [vmem:[#allocation2 + $0x8] sm:$0xff]
    %v84 = vld [vmem:[#allocation5] sm:$0xff]
    %v85 = vld [vmem:[#allocation5 + $0x8] sm:$0xff]
    %v86 = vld [vmem:[#allocation5 + $0x10] sm:$0xff]
    %v87 = vld [vmem:[#allocation5 + $0x18] sm:$0xff]
    %v88 = vld [vmem:[#allocation5 + $0x20] sm:$0xff]
    %v89 = vld [vmem:[#allocation5 + $0x28] sm:$0xff]
    %v90 = vld [vmem:[#allocation5 + $0x30] sm:$0xff]
    %v91 = vld [vmem:[#allocation5 + $0x38] sm:$0xff]
    %v92 = vld [vmem:[#allocation5 + $0x40] sm:$0xff]
    %v93 = vld [vmem:[#allocation5 + $0x48] sm:$0xff]
    %v94 = vld [vmem:[#allocation5 + $0x50] sm:$0xff]
    %v95 = vld [vmem:[#allocation5 + $0x58] sm:$0xff]
    %v96 = vld [vmem:[#allocation5 + $0x60] sm:$0xff]
    %v97 = vld [vmem:[#allocation5 + $0x68] sm:$0xff]
    %v98 = vld [vmem:[#allocation5 + $0x70] sm:$0xff]
    %v99 = vld [vmem:[#allocation5 + $0x78] sm:$0xff]
    %v100 = vld [vmem:[%s2] sm:$0x1]
    %v102 = vlaneseq
    %v103 = vshrl.u32 %v102, 7
    %v104 = vsub.s32 0, %v103
    %v105 = vrot.slane %v100, %v104
    %107 = vmatprep.subr.mxu0 0.0
    %108 = vmatpush1.msra.mxu0 %v84
    %109 = vmatprep.subr.mxu0 0.0
    %110 = vmatpush1.msra.mxu0 %v85
    %111 = vmatprep.subr.mxu0 0.0
    %112 = vmatpush1.msra.mxu0 %v86
    %113 = vmatprep.subr.mxu0 0.0
    %114 = vmatpush1.msra.mxu0 %v87
    %115 = vmatprep.subr.mxu0 0.0
    %116 = vmatpush1.msra.mxu0 %v88
    %117 = vmatprep.subr.mxu0 0.0
    %118 = vmatpush1.msra.mxu0 %v89
    %119 = vmatprep.subr.mxu0 0.0
    %120 = vmatpush1.msra.mxu0 %v90
    %121 = vmatprep.subr.mxu0 0.0
    %122 = vmatpush1.msra.mxu0 %v91
    %123 = vmatprep.subr.mxu0 0.0
    %124 = vmatpush1.msra.mxu0 %v92
    %125 = vmatprep.subr.mxu0 0.0
    %126 = vmatpush1.msra.mxu0 %v93
    %127 = vmatprep.subr.mxu0 0.0
    %128 = vmatpush1.msra.mxu0 %v94
    %129 = vmatprep.subr.mxu0 0.0
    %130 = vmatpush1.msra.mxu0 %v95
    %131 = vmatprep.subr.mxu0 0.0
    %132 = vmatpush1.msra.mxu0 %v96
    %133 = vmatprep.subr.mxu0 0.0
    %134 = vmatpush1.msra.mxu0 %v97
    %135 = vmatprep.subr.mxu0 0.0
    %136 = vmatpush1.msra.mxu0 %v98
    %137 = vmatprep.subr.mxu0 0.0
    %138 = vmatpush1.msra.mxu0 %v99
    %139 = vmatprep.subr.mxu0 0.0
    %140 = vmatpush1.msra.mxu0 0.0
    %141 = vmatprep.subr.mxu0 0.0
    %142 = vmatpush1.msra.mxu0 0.0
    %143 = vmatprep.subr.mxu0 0.0
    %144 = vmatpush1.msra.mxu0 0.0
    %145 = vmatprep.subr.mxu0 0.0
    %146 = vmatpush1.msra.mxu0 0.0
    %147 = vmatprep.subr.mxu0 0.0
    %148 = vmatpush1.msra.mxu0 0.0
    %149 = vmatprep.subr.mxu0 0.0
    %150 = vmatpush1.msra.mxu0 0.0
    %151 = vmatprep.subr.mxu0 0.0
    %152 = vmatpush1.msra.mxu0 0.0
    %153 = vmatprep.subr.mxu0 0.0
    %154 = vmatpush1.msra.mxu0 0.0
    %155 = vmatprep.subr.mxu0 0.0
    %156 = vmatpush1.msra.mxu0 0.0
    %157 = vmatprep.subr.mxu0 0.0
    %158 = vmatpush1.msra.mxu0 0.0
    %159 = vmatprep.subr.mxu0 0.0
    %160 = vmatpush1.msra.mxu0 0.0
    %161 = vmatprep.subr.mxu0 0.0
    %162 = vmatpush1.msra.mxu0 0.0
    %163 = vmatprep.subr.mxu0 0.0
    %164 = vmatpush1.msra.mxu0 0.0
    %165 = vmatprep.subr.mxu0 0.0
    %166 = vmatpush1.msra.mxu0 0.0
    %167 = vmatprep.subr.mxu0 0.0
    %168 = vmatpush1.msra.mxu0 0.0
    %169 = vmatprep.subr.mxu0 0.0
    %170 = vmatpush1.msra.mxu0 0.0
    %171 = vmatprep.mubr.f32.mxu0 0.0
    %172 = vmatmul.mubr.f32.gmra.mrb[0].mxu0 %v82
    %v173 = vpop.f32.mrb[0].mxu0
    %v174 = vadd.f32 %v105, %v173
    %v175 = vpop.f32.mrb[0].mxu0
    %176 = vmatprep.mubr.f32.mxu0 0.0
    %177 = vmatmul.mubr.f32.gmra.mrb[0].mxu0 %v83
    %v178 = vpop.f32.mrb[0].mxu0
    %v179 = vadd.f32 %v105, %v178
    %v180 = vpop.f32.mrb[0].mxu0
    %181 = vdwg.mxu0
    %vm182 = vcmp.gt.f32.partialorder %v174, 0.0
    %vm183 = vcmp.gt.f32.partialorder %v179, 0.0
    %v184 = vmul.f32 %v174, 0.01
    %v185 = vmul.f32 %v179, 0.01
    %v186 = vsel %vm182, %v174, %v184
    %v187 = vsel %vm183, %v179, %v185
    %v188 = vld [vmem:[#allocation7] sm:$0xff]
    %v189 = vld [vmem:[#allocation7 + $0x8] sm:$0xff]
    %v190 = vld [vmem:[#allocation7 + $0x10] sm:$0xff]
    %v191 = vld [vmem:[#allocation7 + $0x18] sm:$0xff]
    %v192 = vld [vmem:[#allocation7 + $0x20] sm:$0xff]
    %v193 = vld [vmem:[#allocation7 + $0x28] sm:$0xff]
    %v194 = vld [vmem:[#allocation7 + $0x30] sm:$0xff]
    %v195 = vld [vmem:[#allocation7 + $0x38] sm:$0xff]
    %v196 = vld [vmem:[#allocation7 + $0x40] sm:$0xff]
    %v197 = vld [vmem:[#allocation7 + $0x48] sm:$0xff]
    %v198 = vld [vmem:[#allocation7 + $0x50] sm:$0xff]
    %v199 = vld [vmem:[#allocation7 + $0x58] sm:$0xff]
    %v200 = vld [vmem:[#allocation7 + $0x60] sm:$0xff]
    %v201 = vld [vmem:[#allocation7 + $0x68] sm:$0xff]
    %v202 = vld [vmem:[#allocation7 + $0x70] sm:$0xff]
    %v203 = vld [vmem:[#allocation7 + $0x78] sm:$0xff]
    %v204 = vld [vmem:[%s4] sm:$0x1]
    %v206 = vlaneseq
    %v207 = vshrl.u32 %v206, 7
    %v208 = vsub.s32 0, %v207
    %v209 = vrot.slane %v204, %v208
    %211 = vmatprep.subr.mxu0 0.0
    %212 = vmatpush1.msra.mxu0 %v188
    %213 = vmatprep.subr.mxu0 0.0
    %214 = vmatpush1.msra.mxu0 %v189
    %215 = vmatprep.subr.mxu0 0.0
    %216 = vmatpush1.msra.mxu0 %v190
    %217 = vmatprep.subr.mxu0 0.0
    %218 = vmatpush1.msra.mxu0 %v191
    %219 = vmatprep.subr.mxu0 0.0
    %220 = vmatpush1.msra.mxu0 %v192
    %221 = vmatprep.subr.mxu0 0.0
    %222 = vmatpush1.msra.mxu0 %v193
    %223 = vmatprep.subr.mxu0 0.0
    %224 = vmatpush1.msra.mxu0 %v194
    %225 = vmatprep.subr.mxu0 0.0
    %226 = vmatpush1.msra.mxu0 %v195
    %227 = vmatprep.subr.mxu0 0.0
    %228 = vmatpush1.msra.mxu0 %v196
    %229 = vmatprep.subr.mxu0 0.0
    %230 = vmatpush1.msra.mxu0 %v197
    %231 = vmatprep.subr.mxu0 0.0
    %232 = vmatpush1.msra.mxu0 %v198
    %233 = vmatprep.subr.mxu0 0.0
    %234 = vmatpush1.msra.mxu0 %v199
    %235 = vmatprep.subr.mxu0 0.0
    %236 = vmatpush1.msra.mxu0 %v200
    %237 = vmatprep.subr.mxu0 0.0
    %238 = vmatpush1.msra.mxu0 %v201
    %239 = vmatprep.subr.mxu0 0.0
    %240 = vmatpush1.msra.mxu0 %v202
    %241 = vmatprep.subr.mxu0 0.0
    %242 = vmatpush1.msra.mxu0 %v203
    %243 = vmatprep.subr.mxu0 0.0
    %244 = vmatpush1.msra.mxu0 0.0
    %245 = vmatprep.subr.mxu0 0.0
    %246 = vmatpush1.msra.mxu0 0.0
    %247 = vmatprep.subr.mxu0 0.0
    %248 = vmatpush1.msra.mxu0 0.0
    %249 = vmatprep.subr.mxu0 0.0
    %250 = vmatpush1.msra.mxu0 0.0
    %251 = vmatprep.subr.mxu0 0.0
    %252 = vmatpush1.msra.mxu0 0.0
    %253 = vmatprep.subr.mxu0 0.0
    %254 = vmatpush1.msra.mxu0 0.0
    %255 = vmatprep.subr.mxu0 0.0
    %256 = vmatpush1.msra.mxu0 0.0
    %257 = vmatprep.subr.mxu0 0.0
    %258 = vmatpush1.msra.mxu0 0.0
    %259 = vmatprep.subr.mxu0 0.0
    %260 = vmatpush1.msra.mxu0 0.0
    %261 = vmatprep.subr.mxu0 0.0
    %262 = vmatpush1.msra.mxu0 0.0
    %263 = vmatprep.subr.mxu0 0.0
    %264 = vmatpush1.msra.mxu0 0.0
    %265 = vmatprep.subr.mxu0 0.0
    %266 = vmatpush1.msra.mxu0 0.0
    %267 = vmatprep.subr.mxu0 0.0
    %268 = vmatpush1.msra.mxu0 0.0
    %269 = vmatprep.subr.mxu0 0.0
    %270 = vmatpush1.msra.mxu0 0.0
    %271 = vmatprep.subr.mxu0 0.0
    %272 = vmatpush1.msra.mxu0 0.0
    %273 = vmatprep.subr.mxu0 0.0
    %274 = vmatpush1.msra.mxu0 0.0
    %275 = vmatprep.mubr.f32.mxu0 0.0
    %276 = vmatmul.mubr.f32.gmra.mrb[0].mxu0 %v186
    %v277 = vpop.f32.mrb[0].mxu0
    %v278 = vadd.f32 %v209, %v277
    %v279 = vpop.f32.mrb[0].mxu0
    %280 = vmatprep.mubr.f32.mxu0 0.0
    %281 = vmatmul.mubr.f32.gmra.mrb[0].mxu0 %v187
    %v282 = vpop.f32.mrb[0].mxu0
    %v283 = vadd.f32 %v209, %v282
    %v284 = vpop.f32.mrb[0].mxu0
    %285 = vdwg.mxu0
    %vm286 = vcmp.gt.f32.partialorder %v278, 0.0
    %vm287 = vcmp.gt.f32.partialorder %v283, 0.0
    %v288 = vmul.f32 %v278, 0.01
    %v289 = vmul.f32 %v283, 0.01
    %v290 = vsel %vm286, %v278, %v288
    %v291 = vsel %vm287, %v283, %v289
    %v292 = vld [vmem:[#allocation8] sm:$0xff]
    %v293 = vld [vmem:[#allocation8 + $0x8] sm:$0xff]
    %v294 = vld [vmem:[#allocation8 + $0x10] sm:$0xff]
    %v295 = vld [vmem:[#allocation8 + $0x18] sm:$0xff]
    %v296 = vld [vmem:[#allocation8 + $0x20] sm:$0xff]
    %v297 = vld [vmem:[#allocation8 + $0x28] sm:$0xff]
    %v298 = vld [vmem:[#allocation8 + $0x30] sm:$0xff]
    %v299 = vld [vmem:[#allocation8 + $0x38] sm:$0xff]
    %v300 = vld [vmem:[#allocation8 + $0x40] sm:$0xff]
    %v301 = vld [vmem:[#allocation8 + $0x48] sm:$0xff]
    %v302 = vld [vmem:[#allocation8 + $0x50] sm:$0xff]
    %v303 = vld [vmem:[#allocation8 + $0x58] sm:$0xff]
    %v304 = vld [vmem:[#allocation8 + $0x60] sm:$0xff]
    %v305 = vld [vmem:[#allocation8 + $0x68] sm:$0xff]
    %v306 = vld [vmem:[#allocation8 + $0x70] sm:$0xff]
    %v307 = vld [vmem:[#allocation8 + $0x78] sm:$0xff]
    %v308 = vld [vmem:[%s6] sm:$0x1]
    %v310 = vlaneseq
    %v311 = vshrl.u32 %v310, 7
    %v312 = vsub.s32 0, %v311
    %v313 = vrot.slane %v308, %v312
    %315 = vmatprep.subr.mxu0 0.0
    %316 = vmatpush1.msra.mxu0 %v292
    %317 = vmatprep.subr.mxu0 0.0
    %318 = vmatpush1.msra.mxu0 %v293
    %319 = vmatprep.subr.mxu0 0.0
    %320 = vmatpush1.msra.mxu0 %v294
    %321 = vmatprep.subr.mxu0 0.0
    %322 = vmatpush1.msra.mxu0 %v295
    %323 = vmatprep.subr.mxu0 0.0
    %324 = vmatpush1.msra.mxu0 %v296
    %325 = vmatprep.subr.mxu0 0.0
    %326 = vmatpush1.msra.mxu0 %v297
    %327 = vmatprep.subr.mxu0 0.0
    %328 = vmatpush1.msra.mxu0 %v298
    %329 = vmatprep.subr.mxu0 0.0
    %330 = vmatpush1.msra.mxu0 %v299
    %331 = vmatprep.subr.mxu0 0.0
    %332 = vmatpush1.msra.mxu0 %v300
    %333 = vmatprep.subr.mxu0 0.0
    %334 = vmatpush1.msra.mxu0 %v301
    %335 = vmatprep.subr.mxu0 0.0
    %336 = vmatpush1.msra.mxu0 %v302
    %337 = vmatprep.subr.mxu0 0.0
    %338 = vmatpush1.msra.mxu0 %v303
    %339 = vmatprep.subr.mxu0 0.0
    %340 = vmatpush1.msra.mxu0 %v304
    %341 = vmatprep.subr.mxu0 0.0
    %342 = vmatpush1.msra.mxu0 %v305
    %343 = vmatprep.subr.mxu0 0.0
    %344 = vmatpush1.msra.mxu0 %v306
    %345 = vmatprep.subr.mxu0 0.0
    %346 = vmatpush1.msra.mxu0 %v307
    %347 = vmatprep.subr.mxu0 0.0
    %348 = vmatpush1.msra.mxu0 0.0
    %349 = vmatprep.subr.mxu0 0.0
    %350 = vmatpush1.msra.mxu0 0.0
    %351 = vmatprep.subr.mxu0 0.0
    %352 = vmatpush1.msra.mxu0 0.0
    %353 = vmatprep.subr.mxu0 0.0
    %354 = vmatpush1.msra.mxu0 0.0
    %355 = vmatprep.subr.mxu0 0.0
    %356 = vmatpush1.msra.mxu0 0.0
    %357 = vmatprep.subr.mxu0 0.0
    %358 = vmatpush1.msra.mxu0 0.0
    %359 = vmatprep.subr.mxu0 0.0
    %360 = vmatpush1.msra.mxu0 0.0
    %361 = vmatprep.subr.mxu0 0.0
    %362 = vmatpush1.msra.mxu0 0.0
    %363 = vmatprep.subr.mxu0 0.0
    %364 = vmatpush1.msra.mxu0 0.0
    %365 = vmatprep.subr.mxu0 0.0
    %366 = vmatpush1.msra.mxu0 0.0
    %367 = vmatprep.subr.mxu0 0.0
    %368 = vmatpush1.msra.mxu0 0.0
    %369 = vmatprep.subr.mxu0 0.0
    %370 = vmatpush1.msra.mxu0 0.0
    %371 = vmatprep.subr.mxu0 0.0
    %372 = vmatpush1.msra.mxu0 0.0
    %373 = vmatprep.subr.mxu0 0.0
    %374 = vmatpush1.msra.mxu0 0.0
    %375 = vmatprep.subr.mxu0 0.0
    %376 = vmatpush1.msra.mxu0 0.0
    %377 = vmatprep.subr.mxu0 0.0
    %378 = vmatpush1.msra.mxu0 0.0
    %379 = vmatprep.mubr.f32.mxu0 0.0
    %380 = vmatmul.mubr.f32.gmra.mrb[0].mxu0 %v290
    %v381 = vpop.f32.mrb[0].mxu0
    %v382 = vadd.f32 %v313, %v381
    %v383 = vpop.f32.mrb[0].mxu0
    %384 = vmatprep.mubr.f32.mxu0 0.0
    %385 = vmatmul.mubr.f32.gmra.mrb[0].mxu0 %v291
    %v386 = vpop.f32.mrb[0].mxu0
    %v387 = vadd.f32 %v313, %v386
    %v388 = vpop.f32.mrb[0].mxu0
    %389 = vdwg.mxu0
    %390 = vst [vmem:[#allocation10] sm:$0xff] %v382
    %391 = vst [vmem:[#allocation10 + $0x8] sm:$0xff] %v387
    // Predicated region
    $region46: #{tpu_custom_call.1} parent=1 // pred_check
      _
    $region47: #{tpu_custom_call.1} parent=1 // pred_check_branch
      %393 = sbr.rel (0) target = $region49
    $region48: #{tpu_custom_call.1} parent=1 // pred_region
      %s395 = ssub.s32 256, 256
      %396 = vsyncadd [#allocation4], %s395
      %s397 = sshll.u32 [#allocation10], 4
      %s398 = int_to_ptr.vmem [resolvable:$true] %s397
      %403 = dma.vmem_to_hbm [thread:$0]  %s398, 256, %s7, [#allocation4], 128, 128, 8
    $region49: #{tpu_custom_call.1} parent=1 // pred_fallthru
      _
    // Predicated region
    $region50: #{tpu_custom_call.1} parent=1 // pred_check
      _
    $region51: #{tpu_custom_call.1} parent=1 // pred_check_branch
      %405 = sbr.rel (0) target = $region53
    $region52: #{tpu_custom_call.1} parent=1 // pred_region
      %406 = dma.done [#allocation4], 256
    $region53: #{tpu_custom_call.1} parent=1 // pred_fallthru
      _
    %407 = vsyncpa [#allocation3], 1
    %408 = vsyncpa [#allocation6], 1
    %409 = vsyncpa [#allocation9], 1
    %410 = vsyncpa [#allocation4], 1

</llo_original>
